<compile_context>
chip_gen: v7x
topology: tpu7x:2x2x1
jax: 0.10.0
libtpu: 0.0.40
codegen_flags: <defaults>
</compile_context>

<pallas_src>
import functools

import jax
import jax.numpy as jnp
from jax.experimental import pallas as pl
from jax.experimental.pallas import tpu as pltpu


def _round_up(x, m):
    return ((x + m - 1) // m) * m


def _cdiv(a, b):
    return -(-a // b)


def _pad_to(x, shape):
    pads = [(0, t - s) for s, t in zip(x.shape, shape)]
    if all(p == (0, 0) for p in pads):
        return x
    return jnp.pad(x, pads)


# --------------------------------------------------------------------------
# Kernel: fused 3-layer MLP (Linear+ReLU, Linear+ReLU, Linear+Tanh)
# --------------------------------------------------------------------------
def actor_mlp_kernel(x_ref, w1_ref, b1_ref, w2_ref, b2_ref, w3_ref, b3_ref, o_ref):
    # layer 1: bf16 MXU inputs, f32 accumulate, f32 bias + ReLU
    h1 = jnp.dot(x_ref[...], w1_ref[...], preferred_element_type=jnp.float32)
    h1 = jnp.maximum(h1 + b1_ref[...], 0.0)
    # layer 2
    h2 = jnp.dot(h1.astype(w2_ref.dtype), w2_ref[...],
                 preferred_element_type=jnp.float32)
    h2 = jnp.maximum(h2 + b2_ref[...], 0.0)
    # output layer + Tanh (f32 elementwise path; padded lanes stay exactly 0)
    out = jnp.dot(h2.astype(w3_ref.dtype), w3_ref[...],
                  preferred_element_type=jnp.float32)
    o_ref[...] = jnp.tanh(out + b3_ref[...]).astype(o_ref.dtype)


# --------------------------------------------------------------------------
# One-time parameter preparation (pad to 128 lanes, cast to MXU dtype)
# --------------------------------------------------------------------------
def prepare_params(params, compute_dtype=jnp.bfloat16):
    """Pad/cast the actor MLP weights once; reuse the result for every act()."""
    w1, b1, w2, b2, w3, b3 = params
    obs, H1 = w1.shape
    H2 = w2.shape[1]
    A = w3.shape[1]

    obs_p = _round_up(obs, 128)
    H1p = _round_up(H1, 128)
    H2p = _round_up(H2, 128)
    Ap = _round_up(A, 128)

    prepared = {
        "w1": _pad_to(w1, (obs_p, H1p)).astype(compute_dtype),
        "b1": _pad_to(b1, (1, H1p)).astype(jnp.float32),
        "w2": _pad_to(w2, (H1p, H2p)).astype(compute_dtype),
        "b2": _pad_to(b2, (1, H2p)).astype(jnp.float32),
        "w3": _pad_to(w3, (H2p, Ap)).astype(compute_dtype),
        "b3": _pad_to(b3, (1, Ap)).astype(jnp.float32),
        "obs": obs, "obs_p": obs_p,
        "H1p": H1p, "H2p": H2p,
        "num_actions": A, "Ap": Ap,
        "compute_dtype": compute_dtype,
    }
    return prepared


def _choose_batch_tile(B, batch_tile):
    """Balanced, 16-sublane-aligned batch tiles; >=2 tiles for v7x megacore."""
    n_tiles = max(1, _cdiv(B, batch_tile))
    # v7x has 2 TensorCores; give the "parallel" grid axis at least 2 tiles
    # once the batch is big enough to be worth splitting.
    if n_tiles < 2 and B >= 32:
        n_tiles = 2
    tb = _round_up(_cdiv(B, n_tiles), 16)   # 16 rows / bf16 vreg
    Bp = _round_up(B, tb)
    return tb, Bp


# --------------------------------------------------------------------------
# Forward wrapper
# --------------------------------------------------------------------------
def base_actor_forward(state, prepared, *, batch_tile=512, out_dtype=jnp.float32):
    """state: [B, obs] float32 -> [B, num_actions] `out_dtype`."""
    B, obs = state.shape
    assert obs == prepared["obs"], "state feature dim does not match params"

    obs_p = prepared["obs_p"]
    H1p, H2p, Ap = prepared["H1p"], prepared["H2p"], prepared["Ap"]
    A = prepared["num_actions"]

    tb, Bp = _choose_batch_tile(B, batch_tile)
    grid = (pl.cdiv(Bp, tb),)

    # Only the activations are padded / cast per call (weights are pre-done).
    xp = _pad_to(state, (Bp, obs_p)).astype(prepared["compute_dtype"])

    w1p, b1p = prepared["w1"], prepared["b1"]
    w2p, b2p = prepared["w2"], prepared["b2"]
    w3p, b3p = prepared["w3"], prepared["b3"]

    flops = 2 * Bp * (obs_p * H1p + H1p * H2p + H2p * Ap)
    bytes_accessed = sum(int(a.size) * a.dtype.itemsize
                         for a in (xp, w1p, b1p, w2p, b2p, w3p, b3p))
    bytes_accessed += Bp * Ap * jnp.dtype(out_dtype).itemsize
    cost = pl.CostEstimate(flops=flops,
                           transcendentals=B * A,   # real tanh outputs only
                           bytes_accessed=bytes_accessed)

    # TODO(synk): if the MLP scales up (H1p/H2p >= 2048), single-buffer the
    # constant-index weight BlockSpecs (pipeline_mode=pl.Buffered(1)) and set
    # vmem_limit_bytes from the resident-weight + double-buffered-activation
    # footprint so it fits v7x's 64 MiB VMEM.
    out = pl.pallas_call(
        actor_mlp_kernel,
        out_shape=jax.ShapeDtypeStruct((Bp, Ap), out_dtype),
        grid=grid,
        in_specs=[
            pl.BlockSpec((tb, obs_p), lambda i: (i, 0)),    # streamed activations
            pl.BlockSpec((obs_p, H1p), lambda i: (0, 0)),   # VMEM-resident weights
            pl.BlockSpec((1, H1p), lambda i: (0, 0)),
            pl.BlockSpec((H1p, H2p), lambda i: (0, 0)),
            pl.BlockSpec((1, H2p), lambda i: (0, 0)),
            pl.BlockSpec((H2p, Ap), lambda i: (0, 0)),
            pl.BlockSpec((1, Ap), lambda i: (0, 0)),
        ],
        out_specs=pl.BlockSpec((tb, Ap), lambda i: (i, 0)),  # lane-dense slab
        compiler_params=pltpu.CompilerParams(
            dimension_semantics=("parallel",)),
        cost_estimate=cost,
    )(xp, w1p, b1p, w2p, b2p, w3p, b3p)

    return out[:B, :A]


# --------------------------------------------------------------------------
# Synthetic init + pure-JAX reference
# --------------------------------------------------------------------------
def init_params(key, obs_size, hidden1, hidden2, num_actions):
    """Deterministic synthetic init (uniform, PyTorch-Linear-like scaling)."""
    ks = jax.random.split(key, 6)

    def lin(kw, kb, fan_in, fan_out):
        bound = 1.0 / jnp.sqrt(fan_in)
        w = jax.random.uniform(kw, (fan_in, fan_out), jnp.float32, -bound, bound)
        b = jax.random.uniform(kb, (1, fan_out), jnp.float32, -bound, bound)
        return w, b

    w1, b1 = lin(ks[0], ks[1], obs_size, hidden1)
    w2, b2 = lin(ks[2], ks[3], hidden1, hidden2)
    w3, b3 = lin(ks[4], ks[5], hidden2, num_actions)
    return (w1, b1, w2, b2, w3, b3)


def reference_forward(state, params):
    w1, b1, w2, b2, w3, b3 = params
    h1 = jnp.maximum(state @ w1 + b1, 0.0)
    h2 = jnp.maximum(h1 @ w2 + b2, 0.0)
    return jnp.tanh(h2 @ w3 + b3)


if __name__ == "__main__":
    B = 8           # batch
    OBS = 32        # observation_size
    H1 = 64         # hidden layer 1
    H2 = 64         # hidden layer 2
    A = 8           # num_actions

    key = jax.random.PRNGKey(0)
    k_state, k_params = jax.random.split(key)

    state = jax.random.normal(k_state, (B, OBS), dtype=jnp.float32)
    params = init_params(k_params, OBS, H1, H2, A)

    prepared = prepare_params(params)            # one-time pad + cast
    out = base_actor_forward(state, prepared)
    out = jax.block_until_ready(out)

    ref = reference_forward(state, params)
    assert out.shape == (B, A)
    # bf16 MXU inputs -> allow ~1e-2-level deviation vs the f32 reference.
    assert jnp.allclose(out, ref, atol=3e-2, rtol=3e-2), "mismatch vs reference"

    print("KERNEL_OK")
</pallas_src>

<mosaic_0001>
module attributes {stable_mosaic.version = 11 : i64} {
  func.func @actor_mlp_kernel(%arg0: i32, %arg1: memref<16x128xbf16, #tpu.memory_space<vmem>>, %arg2: memref<128x128xbf16, #tpu.memory_space<vmem>>, %arg3: memref<1x128xf32, #tpu.memory_space<vmem>>, %arg4: memref<128x128xbf16, #tpu.memory_space<vmem>>, %arg5: memref<1x128xf32, #tpu.memory_space<vmem>>, %arg6: memref<128x128xbf16, #tpu.memory_space<vmem>>, %arg7: memref<1x128xf32, #tpu.memory_space<vmem>>, %arg8: memref<16x128xf32, #tpu.memory_space<vmem>>) attributes {dimension_semantics = [#tpu.dimension_semantics<parallel>], iteration_bounds = array<i64: 1>, scalar_prefetch = 0 : i64, scratch_operands = 0 : i64, tpu.core_type = #tpu.core_type<tc>, window_params = [{transform_indices = @transform_0, window_bounds = array<i64: 16, 128>}, {pipeline_mode = #tpu.pipeline_mode<synchronous>, transform_indices = @transform_1, window_bounds = array<i64: 128, 128>}, {pipeline_mode = #tpu.pipeline_mode<synchronous>, transform_indices = @transform_2, window_bounds = array<i64: 1, 128>}, {pipeline_mode = #tpu.pipeline_mode<synchronous>, transform_indices = @transform_3, window_bounds = array<i64: 128, 128>}, {pipeline_mode = #tpu.pipeline_mode<synchronous>, transform_indices = @transform_4, window_bounds = array<i64: 1, 128>}, {pipeline_mode = #tpu.pipeline_mode<synchronous>, transform_indices = @transform_5, window_bounds = array<i64: 128, 128>}, {pipeline_mode = #tpu.pipeline_mode<synchronous>, transform_indices = @transform_6, window_bounds = array<i64: 1, 128>}, {transform_indices = @transform_7, window_bounds = array<i64: 16, 128>}]} {
    %c0 = arith.constant 0 : index
    %c0_0 = arith.constant 0 : index
    %0 = vector.load %arg1[%c0, %c0_0] : memref<16x128xbf16, #tpu.memory_space<vmem>>, vector<16x128xbf16>
    %c0_1 = arith.constant 0 : index
    %c0_2 = arith.constant 0 : index
    %1 = vector.load %arg2[%c0_1, %c0_2] : memref<128x128xbf16, #tpu.memory_space<vmem>>, vector<128x128xbf16>
    %cst = arith.constant dense<0.000000e+00> : vector<16x128xf32>
    %2 = tpu.matmul %0, %1, %cst {dimension_numbers = #tpu.dot_dimension_numbers<[1], [0], [0], [1], [0, 0, 1, 1], [], []>} : vector<16x128xbf16>, vector<128x128xbf16>, vector<16x128xf32> -> vector<16x128xf32>
    %c0_3 = arith.constant 0 : index
    %c0_4 = arith.constant 0 : index
    %3 = vector.load %arg3[%c0_3, %c0_4] : memref<1x128xf32, #tpu.memory_space<vmem>>, vector<1x128xf32>
    %4 = vector.broadcast %3 : vector<1x128xf32> to vector<16x128xf32>
    %5 = arith.addf %2, %4 : vector<16x128xf32>
    %cst_5 = arith.constant 0.000000e+00 : f32
    %6 = vector.broadcast %cst_5 : f32 to vector<16x128xf32>
    %7 = arith.maximumf %5, %6 : vector<16x128xf32>
    %8 = arith.truncf %7 : vector<16x128xf32> to vector<16x128xbf16>
    %c0_6 = arith.constant 0 : index
    %c0_7 = arith.constant 0 : index
    %9 = vector.load %arg4[%c0_6, %c0_7] : memref<128x128xbf16, #tpu.memory_space<vmem>>, vector<128x128xbf16>
    %cst_8 = arith.constant dense<0.000000e+00> : vector<16x128xf32>
    %10 = tpu.matmul %8, %9, %cst_8 {dimension_numbers = #tpu.dot_dimension_numbers<[1], [0], [0], [1], [0, 0, 1, 1], [], []>} : vector<16x128xbf16>, vector<128x128xbf16>, vector<16x128xf32> -> vector<16x128xf32>
    %c0_9 = arith.constant 0 : index
    %c0_10 = arith.constant 0 : index
    %11 = vector.load %arg5[%c0_9, %c0_10] : memref<1x128xf32, #tpu.memory_space<vmem>>, vector<1x128xf32>
    %12 = vector.broadcast %11 : vector<1x128xf32> to vector<16x128xf32>
    %13 = arith.addf %10, %12 : vector<16x128xf32>
    %cst_11 = arith.constant 0.000000e+00 : f32
    %14 = vector.broadcast %cst_11 : f32 to vector<16x128xf32>
    %15 = arith.maximumf %13, %14 : vector<16x128xf32>
    %16 = arith.truncf %15 : vector<16x128xf32> to vector<16x128xbf16>
    %c0_12 = arith.constant 0 : index
    %c0_13 = arith.constant 0 : index
    %17 = vector.load %arg6[%c0_12, %c0_13] : memref<128x128xbf16, #tpu.memory_space<vmem>>, vector<128x128xbf16>
    %cst_14 = arith.constant dense<0.000000e+00> : vector<16x128xf32>
    %18 = tpu.matmul %16, %17, %cst_14 {dimension_numbers = #tpu.dot_dimension_numbers<[1], [0], [0], [1], [0, 0, 1, 1], [], []>} : vector<16x128xbf16>, vector<128x128xbf16>, vector<16x128xf32> -> vector<16x128xf32>
    %c0_15 = arith.constant 0 : index
    %c0_16 = arith.constant 0 : index
    %19 = vector.load %arg7[%c0_15, %c0_16] : memref<1x128xf32, #tpu.memory_space<vmem>>, vector<1x128xf32>
    %20 = vector.broadcast %19 : vector<1x128xf32> to vector<16x128xf32>
    %21 = arith.addf %18, %20 : vector<16x128xf32>
    %22 = math.tanh %21 : vector<16x128xf32>
    %c0_17 = arith.constant 0 : index
    %c0_18 = arith.constant 0 : index
    %23 = vector.load %arg8[%c0_17, %c0_18] : memref<16x128xf32, #tpu.memory_space<vmem>>, vector<16x128xf32>
    tpu.vector_store %arg8[%c0_17, %c0_18], %22 {strides = array<i32>} : memref<16x128xf32, #tpu.memory_space<vmem>>, vector<16x128xf32>,
    return
  }
  func.func @transform_0(%arg0: i32) -> (i32, i32) {
    %c0_i32 = arith.constant 0 : i32
    %c0_i32_0 = arith.constant 0 : i32
    return %arg0, %c0_i32 : i32, i32
  }
  func.func @transform_1(%arg0: i32) -> (i32, i32) {
    %c0_i32 = arith.constant 0 : i32
    %c0_i32_0 = arith.constant 0 : i32
    %c0_i32_1 = arith.constant 0 : i32
    return %c0_i32, %c0_i32_0 : i32, i32
  }
  func.func @transform_2(%arg0: i32) -> (i32, i32) {
    %c0_i32 = arith.constant 0 : i32
    %c0_i32_0 = arith.constant 0 : i32
    %c0_i32_1 = arith.constant 0 : i32
    return %c0_i32, %c0_i32_0 : i32, i32
  }
  func.func @transform_3(%arg0: i32) -> (i32, i32) {
    %c0_i32 = arith.constant 0 : i32
    %c0_i32_0 = arith.constant 0 : i32
    %c0_i32_1 = arith.constant 0 : i32
    return %c0_i32, %c0_i32_0 : i32, i32
  }
  func.func @transform_4(%arg0: i32) -> (i32, i32) {
    %c0_i32 = arith.constant 0 : i32
    %c0_i32_0 = arith.constant 0 : i32
    %c0_i32_1 = arith.constant 0 : i32
    return %c0_i32, %c0_i32_0 : i32, i32
  }
  func.func @transform_5(%arg0: i32) -> (i32, i32) {
    %c0_i32 = arith.constant 0 : i32
    %c0_i32_0 = arith.constant 0 : i32
    %c0_i32_1 = arith.constant 0 : i32
    return %c0_i32, %c0_i32_0 : i32, i32
  }
  func.func @transform_6(%arg0: i32) -> (i32, i32) {
    %c0_i32 = arith.constant 0 : i32
    %c0_i32_0 = arith.constant 0 : i32
    %c0_i32_1 = arith.constant 0 : i32
    return %c0_i32, %c0_i32_0 : i32, i32
  }
  func.func @transform_7(%arg0: i32) -> (i32, i32) {
    %c0_i32 = arith.constant 0 : i32
    %c0_i32_0 = arith.constant 0 : i32
    return %arg0, %c0_i32 : i32, i32
  }
}

</mosaic_0001>

<llo_original>
// kernel: tpu_custom_call.1
$region0: #{tpu_custom_call.1}
  #allocation0 [shape = 'u32[]', space=smem, size = 0x4, offset = 0x4, fixed_abs, tag = 'smem constant byte address 0x4 - core index']
  #allocation1 [shape = 'u32[144,128]{1,0:T(1,128)}', space=vmem, size = 0x12000, scoped, tag = 'internal scratch']
  %s0 = inlined_call_operand.hbm [shape: bf16[16,128], index: 0, kind: input, shape index: {}]
  %s1 = inlined_call_operand.hbm [shape: bf16[128,128], index: 1, kind: input, shape index: {}]
  %s2 = inlined_call_operand.vmem [shape: f32[1,128], index: 2, kind: input, shape index: {}]
  %s3 = inlined_call_operand.hbm [shape: bf16[128,128], index: 3, kind: input, shape index: {}]
  %s4 = inlined_call_operand.vmem [shape: f32[1,128], index: 4, kind: input, shape index: {}]
  %s5 = inlined_call_operand.hbm [shape: bf16[128,128], index: 5, kind: input, shape index: {}]
  %s6 = inlined_call_operand.vmem [shape: f32[1,128], index: 6, kind: input, shape index: {}]
  %s7 = inlined_call_operand.hbm [shape: f32[16,128], index: 7, kind: output, shape index: {}]
  %s8 = sld [smem:[#allocation0]]
  $region54: #{tpu_custom_call.1} parent=0
    _
  %s10 = ssub.s32 1, %s8
  %s11 = scalar_select 0, %s10, %s8
  $region1: #{tpu_custom_call.1} parent=0
    #allocation2 [shape = 'u8[4096]{0}', space=vmem, size = 0x1000, scoped, tag = 'input window, operand 0, single buffered']
    #allocation3 [shape = 's32[1]{0}', space=sflag, size = 0x4, scoped, tag = 'scoped memory for tpu_custom_call.1']
    #allocation4 [shape = 's32[1]{0}', space=sflag, size = 0x4, scoped, tag = 'scoped memory for tpu_custom_call.1']
    #allocation5 [shape = 'u8[32768]{0}', space=vmem, size = 0x8000, scoped, tag = 'input window, operand 1, single buffered']
    #allocation6 [shape = 's32[1]{0}', space=sflag, size = 0x4, scoped, tag = 'scoped memory for tpu_custom_call.1']
    #allocation7 [shape = 'u8[32768]{0}', space=vmem, size = 0x8000, scoped, tag = 'input window, operand 3, single buffered']
    #allocation8 [shape = 'u8[32768]{0}', space=vmem, size = 0x8000, scoped, tag = 'input window, operand 5, single buffered']
    #allocation9 [shape = 's32[1]{0}', space=sflag, size = 0x4, scoped, tag = 'scoped memory for tpu_custom_call.1']
    #allocation10 [shape = 'u8[8192]{0}', space=vmem, size = 0x2000, scoped, tag = 'output window, operand 0, single buffered']
    %12 = vsyncpa [#allocation3], 0
    %13 = vsyncpa [#allocation6], 0
    %14 = vsyncpa [#allocation9], 0
    %15 = vsyncpa [#allocation4], 0
    // Predicated region
    $region2: #{tpu_custom_call.1} parent=1 // pred_check
      _
    $region3: #{tpu_custom_call.1} parent=1 // pred_check_branch
      %17 = sbr.rel (0) target = $region5
    $region4: #{tpu_custom_call.1} parent=1 // pred_region
      %s19 = ssub.s32 128, 128
      %20 = vsyncadd [#allocation3], %s19
      %s21 = sshll.u32 [#allocation2], 4
      %s22 = int_to_ptr.vmem [resolvable:$true] %s21
      %27 = dma.hbm_to_vmem [thread:$0]  %s0, 128, %s22, [#allocation3], 64, 64, 4
    $region5: #{tpu_custom_call.1} parent=1 // pred_fallthru
      _
    // Predicated region
    $region6: #{tpu_custom_call.1} parent=1 // pred_check
      _
    $region7: #{tpu_custom_call.1} parent=1 // pred_check_branch
      %29 = sbr.rel (0) target = $region9
    $region8: #{tpu_custom_call.1} parent=1 // pred_region
      %s31 = ssub.s32 1024, 1024
      %32 = vsyncadd [#allocation6], %s31
      %s33 = sshll.u32 [#allocation5], 4
      %s34 = int_to_ptr.vmem [resolvable:$true] %s33
      %39 = dma.hbm_to_vmem [thread:$0]  %s1, 1024, %s34, [#allocation6], 64, 64, 4
    $region9: #{tpu_custom_call.1} parent=1 // pred_fallthru
      _
    // Predicated region
    $region10: #{tpu_custom_call.1} parent=1 // pred_check
      _
    $region11: #{tpu_custom_call.1} parent=1 // pred_check_branch
      %41 = sbr.rel (0) target = $region13
    $region12: #{tpu_custom_call.1} parent=1 // pred_region
      _
    $region13: #{tpu_custom_call.1} parent=1 // pred_fallthru
      _
    // Predicated region
    $region14: #{tpu_custom_call.1} parent=1 // pred_check
      _
    $region15: #{tpu_custom_call.1} parent=1 // pred_check_branch
      %43 = sbr.rel (0) target = $region17
    $region16: #{tpu_custom_call.1} parent=1 // pred_region
      %s45 = ssub.s32 1024, 1024
      %46 = vsyncadd [#allocation6], %s45
      %s47 = sshll.u32 [#allocation7], 4
      %s48 = int_to_ptr.vmem [resolvable:$true] %s47
      %53 = dma.hbm_to_vmem [thread:$0]  %s3, 1024, %s48, [#allocation6], 64, 64, 4
    $region17: #{tpu_custom_call.1} parent=1 // pred_fallthru
      _
    // Predicated region
    $region18: #{tpu_custom_call.1} parent=1 // pred_check
      _
    $region19: #{tpu_custom_call.1} parent=1 // pred_check_branch
      %55 = sbr.rel (0) target = $region21
    $region20: #{tpu_custom_call.1} parent=1 // pred_region
      _
    $region21: #{tpu_custom_call.1} parent=1 // pred_fallthru
      _
    // Predicated region
    $region22: #{tpu_custom_call.1} parent=1 // pred_check
      _
    $region23: #{tpu_custom_call.1} parent=1 // pred_check_branch
      %57 = sbr.rel (0) target = $region25
    $region24: #{tpu_custom_call.1} parent=1 // pred_region
      %s59 = ssub.s32 1024, 1024
      %60 = vsyncadd [#allocation9], %s59
      %s61 = sshll.u32 [#allocation8], 4
      %s62 = int_to_ptr.vmem [resolvable:$true] %s61
      %67 = dma.hbm_to_vmem [thread:$0]  %s5, 1024, %s62, [#allocation9], 64, 64, 4
    $region25: #{tpu_custom_call.1} parent=1 // pred_fallthru
      _
    // Predicated region
    $region26: #{tpu_custom_call.1} parent=1 // pred_check
      _
    $region27: #{tpu_custom_call.1} parent=1 // pred_check_branch
      %69 = sbr.rel (0) target = $region29
    $region28: #{tpu_custom_call.1} parent=1 // pred_region
      _
    $region29: #{tpu_custom_call.1} parent=1 // pred_fallthru
      _
    // Predicated region
    $region30: #{tpu_custom_call.1} parent=1 // pred_check
      _
    $region31: #{tpu_custom_call.1} parent=1 // pred_check_branch
      %71 = sbr.rel (0) target = $region33
    $region32: #{tpu_custom_call.1} parent=1 // pred_region
      %72 = dma.done [#allocation3], 128
    $region33: #{tpu_custom_call.1} parent=1 // pred_fallthru
      _
    // Predicated region
    $region34: #{tpu_custom_call.1} parent=1 // pred_check
      _
    $region35: #{tpu_custom_call.1} parent=1 // pred_check_branch
      %74 = sbr.rel (0) target = $region37
    $region36: #{tpu_custom_call.1} parent=1 // pred_region
      %75 = dma.done [#allocation6], 1024
    $region37: #{tpu_custom_call.1} parent=1 // pred_fallthru
      _
    // Predicated region
    $region38: #{tpu_custom_call.1} parent=1 // pred_check
      _
    $region39: #{tpu_custom_call.1} parent=1 // pred_check_branch
      %77 = sbr.rel (0) target = $region41
    $region40: #{tpu_custom_call.1} parent=1 // pred_region
      %78 = dma.done [#allocation6], 1024
    $region41: #{tpu_custom_call.1} parent=1 // pred_fallthru
      _
    // Predicated region
    $region42: #{tpu_custom_call.1} parent=1 // pred_check
      _
    $region43: #{tpu_custom_call.1} parent=1 // pred_check_branch
      %80 = sbr.rel (0) target = $region45
    $region44: #{tpu_custom_call.1} parent=1 // pred_region
      %81 = dma.done [#allocation9], 1024
    $region45: #{tpu_custom_call.1} parent=1 // pred_fallthru
      _
    %v83 = vld [vmem:[#allocation2] sm:$0xf]
    %v84 = vld [vmem:[#allocation2 + $0x4] sm:$0xf]
    %v85 = vld [vmem:[#allocation5] sm:$0xf]
    %v86 = vld [vmem:[#allocation5 + $0x4] sm:$0xf]
    %v87 = vld [vmem:[#allocation5 + $0x8] sm:$0xf]
    %v88 = vld [vmem:[#allocation5 + $0xc] sm:$0xf]
    %v89 = vld [vmem:[#allocation5 + $0x10] sm:$0xf]
    %v90 = vld [vmem:[#allocation5 + $0x14] sm:$0xf]
    %v91 = vld [vmem:[#allocation5 + $0x18] sm:$0xf]
    %v92 = vld [vmem:[#allocation5 + $0x1c] sm:$0xf]
    %v93 = vld [vmem:[#allocation5 + $0x20] sm:$0xf]
    %v94 = vld [vmem:[#allocation5 + $0x24] sm:$0xf]
    %v95 = vld [vmem:[#allocation5 + $0x28] sm:$0xf]
    %v96 = vld [vmem:[#allocation5 + $0x2c] sm:$0xf]
    %v97 = vld [vmem:[#allocation5 + $0x30] sm:$0xf]
    %v98 = vld [vmem:[#allocation5 + $0x34] sm:$0xf]
    %v99 = vld [vmem:[#allocation5 + $0x38] sm:$0xf]
    %v100 = vld [vmem:[#allocation5 + $0x3c] sm:$0xf]
    %v101 = vld [vmem:[%s2] sm:$0x1]
    %v103 = vlaneseq
    %v104 = vshrl.u32 %v103, 7
    %v105 = vsub.s32 0, %v104
    %v106 = vrot.slane %v101, %v105
    %v110 = vunpack.c.l.b16 %v83
    %v111 = vunpack.c.l.b16 %v84
    %v112 = vpack.c.b16 %v111, %v110
    %v130 = vunpack.c.l.b16 %v85
    %v131 = vunpack.c.l.b16 %v86
    %v132 = vunpack.c.l.b16 %v87
    %v133 = vunpack.c.l.b16 %v88
    %v134 = vunpack.c.l.b16 %v89
    %v135 = vunpack.c.l.b16 %v90
    %v136 = vunpack.c.l.b16 %v91
    %v137 = vunpack.c.l.b16 %v92
    %v138 = vunpack.c.l.b16 %v93
    %v139 = vunpack.c.l.b16 %v94
    %v140 = vunpack.c.l.b16 %v95
    %v141 = vunpack.c.l.b16 %v96
    %v142 = vunpack.c.l.b16 %v97
    %v143 = vunpack.c.l.b16 %v98
    %v144 = vunpack.c.l.b16 %v99
    %v145 = vunpack.c.l.b16 %v100
    %v146 = vpack.c.b16 %v131, %v130
    %v147 = vpack.c.b16 %v133, %v132
    %v148 = vpack.c.b16 %v135, %v134
    %v149 = vpack.c.b16 %v137, %v136
    %v150 = vpack.c.b16 %v139, %v138
    %v151 = vpack.c.b16 %v141, %v140
    %v152 = vpack.c.b16 %v143, %v142
    %v153 = vpack.c.b16 %v145, %v144
    %162 = vmatprep.subr.bf16.mxu0 0
    %163 = vmatpush1.bf16.msra.mxu0 %v146
    %164 = vmatprep.subr.bf16.mxu0 0
    %165 = vmatpush1.bf16.msra.mxu0 %v147
    %166 = vmatprep.subr.bf16.mxu0 0
    %167 = vmatpush1.bf16.msra.mxu0 %v148
    %168 = vmatprep.subr.bf16.mxu0 0
    %169 = vmatpush1.bf16.msra.mxu0 %v149
    %170 = vmatprep.subr.bf16.mxu0 0
    %171 = vmatpush1.bf16.msra.mxu0 %v150
    %172 = vmatprep.subr.bf16.mxu0 0
    %173 = vmatpush1.bf16.msra.mxu0 %v151
    %174 = vmatprep.subr.bf16.mxu0 0
    %175 = vmatpush1.bf16.msra.mxu0 %v152
    %176 = vmatprep.subr.bf16.mxu0 0
    %177 = vmatpush1.bf16.msra.mxu0 %v153
    %178 = vmatprep.subr.bf16.mxu0 0
    %179 = vmatpush1.bf16.msra.mxu0 0
    %180 = vmatprep.subr.bf16.mxu0 0
    %181 = vmatpush1.bf16.msra.mxu0 0
    %182 = vmatprep.subr.bf16.mxu0 0
    %183 = vmatpush1.bf16.msra.mxu0 0
    %184 = vmatprep.subr.bf16.mxu0 0
    %185 = vmatpush1.bf16.msra.mxu0 0
    %186 = vmatprep.subr.bf16.mxu0 0
    %187 = vmatpush1.bf16.msra.mxu0 0
    %188 = vmatprep.subr.bf16.mxu0 0
    %189 = vmatpush1.bf16.msra.mxu0 0
    %190 = vmatprep.subr.bf16.mxu0 0
    %191 = vmatpush1.bf16.msra.mxu0 0
    %192 = vmatprep.subr.bf16.mxu0 0
    %193 = vmatpush1.bf16.msra.mxu0 0
    %194 = vmatprep.mubr.bf16.mxu0 0
    %195 = vmatmul.mubr.bf16.gmra.mrb[0].mxu0 %v112
    %v196 = vpop.f32.mrb[0].mxu0
    %v197 = vadd.f32 %v106, %v196
    %v198 = vpop.f32.mrb[0].mxu0
    %v199 = vpop.f32.mrb[0].mxu0
    %v200 = vadd.f32 %v106, %v199
    %v201 = vpop.f32.mrb[0].mxu0
    %202 = vdwg.mxu0
    %v203 = vmax.f32 %v197, 0.0
    %v204 = vmax.f32 %v200, 0.0
    %v205 = vpack.c.bf16 %v204, %v203
    %v206 = vld [vmem:[#allocation7] sm:$0xf]
    %v207 = vld [vmem:[#allocation7 + $0x4] sm:$0xf]
    %v208 = vld [vmem:[#allocation7 + $0x8] sm:$0xf]
    %v209 = vld [vmem:[#allocation7 + $0xc] sm:$0xf]
    %v210 = vld [vmem:[#allocation7 + $0x10] sm:$0xf]
    %v211 = vld [vmem:[#allocation7 + $0x14] sm:$0xf]
    %v212 = vld [vmem:[#allocation7 + $0x18] sm:$0xf]
    %v213 = vld [vmem:[#allocation7 + $0x1c] sm:$0xf]
    %v214 = vld [vmem:[#allocation7 + $0x20] sm:$0xf]
    %v215 = vld [vmem:[#allocation7 + $0x24] sm:$0xf]
    %v216 = vld [vmem:[#allocation7 + $0x28] sm:$0xf]
    %v217 = vld [vmem:[#allocation7 + $0x2c] sm:$0xf]
    %v218 = vld [vmem:[#allocation7 + $0x30] sm:$0xf]
    %v219 = vld [vmem:[#allocation7 + $0x34] sm:$0xf]
    %v220 = vld [vmem:[#allocation7 + $0x38] sm:$0xf]
    %v221 = vld [vmem:[#allocation7 + $0x3c] sm:$0xf]
    %v222 = vld [vmem:[%s4] sm:$0x1]
    %v224 = vlaneseq
    %v225 = vshrl.u32 %v224, 7
    %v226 = vsub.s32 0, %v225
    %v227 = vrot.slane %v222, %v226
    %v245 = vunpack.c.l.b16 %v206
    %v246 = vunpack.c.l.b16 %v207
    %v247 = vunpack.c.l.b16 %v208
    %v248 = vunpack.c.l.b16 %v209
    %v249 = vunpack.c.l.b16 %v210
    %v250 = vunpack.c.l.b16 %v211
    %v251 = vunpack.c.l.b16 %v212
    %v252 = vunpack.c.l.b16 %v213
    %v253 = vunpack.c.l.b16 %v214
    %v254 = vunpack.c.l.b16 %v215
    %v255 = vunpack.c.l.b16 %v216
    %v256 = vunpack.c.l.b16 %v217
    %v257 = vunpack.c.l.b16 %v218
    %v258 = vunpack.c.l.b16 %v219
    %v259 = vunpack.c.l.b16 %v220
    %v260 = vunpack.c.l.b16 %v221
    %v261 = vpack.c.b16 %v246, %v245
    %v262 = vpack.c.b16 %v248, %v247
    %v263 = vpack.c.b16 %v250, %v249
    %v264 = vpack.c.b16 %v252, %v251
    %v265 = vpack.c.b16 %v254, %v253
    %v266 = vpack.c.b16 %v256, %v255
    %v267 = vpack.c.b16 %v258, %v257
    %v268 = vpack.c.b16 %v260, %v259
    %277 = vmatprep.subr.bf16.mxu0 0
    %278 = vmatpush1.bf16.msra.mxu0 %v261
    %279 = vmatprep.subr.bf16.mxu0 0
    %280 = vmatpush1.bf16.msra.mxu0 %v262
    %281 = vmatprep.subr.bf16.mxu0 0
    %282 = vmatpush1.bf16.msra.mxu0 %v263
    %283 = vmatprep.subr.bf16.mxu0 0
    %284 = vmatpush1.bf16.msra.mxu0 %v264
    %285 = vmatprep.subr.bf16.mxu0 0
    %286 = vmatpush1.bf16.msra.mxu0 %v265
    %287 = vmatprep.subr.bf16.mxu0 0
    %288 = vmatpush1.bf16.msra.mxu0 %v266
    %289 = vmatprep.subr.bf16.mxu0 0
    %290 = vmatpush1.bf16.msra.mxu0 %v267
    %291 = vmatprep.subr.bf16.mxu0 0
    %292 = vmatpush1.bf16.msra.mxu0 %v268
    %293 = vmatprep.subr.bf16.mxu0 0
    %294 = vmatpush1.bf16.msra.mxu0 0
    %295 = vmatprep.subr.bf16.mxu0 0
    %296 = vmatpush1.bf16.msra.mxu0 0
    %297 = vmatprep.subr.bf16.mxu0 0
    %298 = vmatpush1.bf16.msra.mxu0 0
    %299 = vmatprep.subr.bf16.mxu0 0
    %300 = vmatpush1.bf16.msra.mxu0 0
    %301 = vmatprep.subr.bf16.mxu0 0
    %302 = vmatpush1.bf16.msra.mxu0 0
    %303 = vmatprep.subr.bf16.mxu0 0
    %304 = vmatpush1.bf16.msra.mxu0 0
    %305 = vmatprep.subr.bf16.mxu0 0
    %306 = vmatpush1.bf16.msra.mxu0 0
    %307 = vmatprep.subr.bf16.mxu0 0
    %308 = vmatpush1.bf16.msra.mxu0 0
    %309 = vmatprep.mubr.bf16.mxu0 0
    %310 = vmatmul.mubr.bf16.gmra.mrb[0].mxu0 %v205
    %v311 = vpop.f32.mrb[0].mxu0
    %v312 = vadd.f32 %v227, %v311
    %v313 = vpop.f32.mrb[0].mxu0
    %v314 = vpop.f32.mrb[0].mxu0
    %v315 = vadd.f32 %v227, %v314
    %v316 = vpop.f32.mrb[0].mxu0
    %317 = vdwg.mxu0
    %v318 = vmax.f32 %v312, 0.0
    %v319 = vmax.f32 %v315, 0.0
    %v320 = vpack.c.bf16 %v319, %v318
    %v321 = vld [vmem:[#allocation8] sm:$0xf]
    %v322 = vld [vmem:[#allocation8 + $0x4] sm:$0xf]
    %v323 = vld [vmem:[#allocation8 + $0x8] sm:$0xf]
    %v324 = vld [vmem:[#allocation8 + $0xc] sm:$0xf]
    %v325 = vld [vmem:[#allocation8 + $0x10] sm:$0xf]
    %v326 = vld [vmem:[#allocation8 + $0x14] sm:$0xf]
    %v327 = vld [vmem:[#allocation8 + $0x18] sm:$0xf]
    %v328 = vld [vmem:[#allocation8 + $0x1c] sm:$0xf]
    %v329 = vld [vmem:[#allocation8 + $0x20] sm:$0xf]
    %v330 = vld [vmem:[#allocation8 + $0x24] sm:$0xf]
    %v331 = vld [vmem:[#allocation8 + $0x28] sm:$0xf]
    %v332 = vld [vmem:[#allocation8 + $0x2c] sm:$0xf]
    %v333 = vld [vmem:[#allocation8 + $0x30] sm:$0xf]
    %v334 = vld [vmem:[#allocation8 + $0x34] sm:$0xf]
    %v335 = vld [vmem:[#allocation8 + $0x38] sm:$0xf]
    %v336 = vld [vmem:[#allocation8 + $0x3c] sm:$0xf]
    %v337 = vld [vmem:[%s6] sm:$0x1]
    %v339 = vlaneseq
    %v340 = vshrl.u32 %v339, 7
    %v341 = vsub.s32 0, %v340
    %v342 = vrot.slane %v337, %v341
    %v360 = vunpack.c.l.b16 %v321
    %v361 = vunpack.c.l.b16 %v322
    %v362 = vunpack.c.l.b16 %v323
    %v363 = vunpack.c.l.b16 %v324
    %v364 = vunpack.c.l.b16 %v325
    %v365 = vunpack.c.l.b16 %v326
    %v366 = vunpack.c.l.b16 %v327
    %v367 = vunpack.c.l.b16 %v328
    %v368 = vunpack.c.l.b16 %v329
    %v369 = vunpack.c.l.b16 %v330
    %v370 = vunpack.c.l.b16 %v331
    %v371 = vunpack.c.l.b16 %v332
    %v372 = vunpack.c.l.b16 %v333
    %v373 = vunpack.c.l.b16 %v334
    %v374 = vunpack.c.l.b16 %v335
    %v375 = vunpack.c.l.b16 %v336
    %v376 = vpack.c.b16 %v361, %v360
    %v377 = vpack.c.b16 %v363, %v362
    %v378 = vpack.c.b16 %v365, %v364
    %v379 = vpack.c.b16 %v367, %v366
    %v380 = vpack.c.b16 %v369, %v368
    %v381 = vpack.c.b16 %v371, %v370
    %v382 = vpack.c.b16 %v373, %v372
    %v383 = vpack.c.b16 %v375, %v374
    %392 = vmatprep.subr.bf16.mxu0 0
    %393 = vmatpush1.bf16.msra.mxu0 %v376
    %394 = vmatprep.subr.bf16.mxu0 0
    %395 = vmatpush1.bf16.msra.mxu0 %v377
    %396 = vmatprep.subr.bf16.mxu0 0
    %397 = vmatpush1.bf16.msra.mxu0 %v378
    %398 = vmatprep.subr.bf16.mxu0 0
    %399 = vmatpush1.bf16.msra.mxu0 %v379
    %400 = vmatprep.subr.bf16.mxu0 0
    %401 = vmatpush1.bf16.msra.mxu0 %v380
    %402 = vmatprep.subr.bf16.mxu0 0
    %403 = vmatpush1.bf16.msra.mxu0 %v381
    %404 = vmatprep.subr.bf16.mxu0 0
    %405 = vmatpush1.bf16.msra.mxu0 %v382
    %406 = vmatprep.subr.bf16.mxu0 0
    %407 = vmatpush1.bf16.msra.mxu0 %v383
    %408 = vmatprep.subr.bf16.mxu0 0
    %409 = vmatpush1.bf16.msra.mxu0 0
    %410 = vmatprep.subr.bf16.mxu0 0
    %411 = vmatpush1.bf16.msra.mxu0 0
    %412 = vmatprep.subr.bf16.mxu0 0
    %413 = vmatpush1.bf16.msra.mxu0 0
    %414 = vmatprep.subr.bf16.mxu0 0
    %415 = vmatpush1.bf16.msra.mxu0 0
    %416 = vmatprep.subr.bf16.mxu0 0
    %417 = vmatpush1.bf16.msra.mxu0 0
    %418 = vmatprep.subr.bf16.mxu0 0
    %419 = vmatpush1.bf16.msra.mxu0 0
    %420 = vmatprep.subr.bf16.mxu0 0
    %421 = vmatpush1.bf16.msra.mxu0 0
    %422 = vmatprep.subr.bf16.mxu0 0
    %423 = vmatpush1.bf16.msra.mxu0 0
    %424 = vmatprep.mubr.bf16.mxu0 0
    %425 = vmatmul.mubr.bf16.gmra.mrb[0].mxu0 %v320
    %v426 = vpop.f32.mrb[0].mxu0
    %v427 = vadd.f32 %v342, %v426
    %v428 = vpop.f32.mrb[0].mxu0
    %v429 = vpop.f32.mrb[0].mxu0
    %v430 = vadd.f32 %v342, %v429
    %v431 = vpop.f32.mrb[0].mxu0
    %432 = vdwg.mxu0
    %v433 = vtanh.pop %v427
    %v434 = vtanh.pop %v430
    %435 = vst [vmem:[#allocation10] sm:$0xff] %v433
    %436 = vst [vmem:[#allocation10 + $0x8] sm:$0xff] %v434
    // Predicated region
    $region46: #{tpu_custom_call.1} parent=1 // pred_check
      _
    $region47: #{tpu_custom_call.1} parent=1 // pred_check_branch
      %438 = sbr.rel (0) target = $region49
    $region48: #{tpu_custom_call.1} parent=1 // pred_region
      %s440 = ssub.s32 256, 256
      %441 = vsyncadd [#allocation4], %s440
      %s442 = sshll.u32 [#allocation10], 4
      %s443 = int_to_ptr.vmem [resolvable:$true] %s442
      %448 = dma.vmem_to_hbm [thread:$0]  %s443, 256, %s7, [#allocation4], 128, 128, 8
    $region49: #{tpu_custom_call.1} parent=1 // pred_fallthru
      _
    // Predicated region
    $region50: #{tpu_custom_call.1} parent=1 // pred_check
      _
    $region51: #{tpu_custom_call.1} parent=1 // pred_check_branch
      %450 = sbr.rel (0) target = $region53
    $region52: #{tpu_custom_call.1} parent=1 // pred_region
      %451 = dma.done [#allocation4], 256
    $region53: #{tpu_custom_call.1} parent=1 // pred_fallthru
      _
    %452 = vsyncpa [#allocation3], 1
    %453 = vsyncpa [#allocation6], 1
    %454 = vsyncpa [#allocation9], 1
    %455 = vsyncpa [#allocation4], 1

</llo_original>
